<compile_context>
chip_gen: v7x
topology: tpu7x:2x2x1
jax: 0.10.0
libtpu: 0.0.40
codegen_flags: <defaults>
</compile_context>

<pallas_src>
import functools

import jax
import jax.numpy as jnp
from jax import lax
from jax.experimental import pallas as pl
from jax.experimental.pallas import tpu as pltpu


def _cdiv(a, b):
    return -(-a // b)


def ffd_kernel(x_ref, w1_ref, b1_ref, w2_ref, b2_ref, o_ref, *, chunk):
    """One batch tile.

    x_ref:  (tb, n_input)       f32  -- straight from HBM (no wrapper pass)
    w1_ref: (n_hidden, n_input) bf16 -- resident (constant index_map)
    b1_ref: (n_hidden, 1)       f32  -- resident
    w2_ref: (n_out, n_hidden)   bf16 -- resident
    b2_ref: (n_out, 1)          f32  -- resident
    o_ref:  (n_out, tb)         f32  -- batch on the lane axis (lane-dense vst)
    """
    tb = x_ref.shape[0]
    n_chunks = tb // chunk

    w1 = w1_ref[...]            # (n_hidden, n_input) bf16
    b1 = b1_ref[...]            # (n_hidden, 1)       f32
    w2 = w2_ref[...]            # (n_out, n_hidden)   bf16
    b2 = b2_ref[...]            # (n_out, 1)          f32

    # Chunked inner loop: hidden activation for one chunk stays in vregs
    # instead of round-tripping through VMEM as a whole-tile temporary.
    @pl.loop(0, n_chunks)
    def _(c):
        start = pl.multiple_of(c * chunk, chunk)
        xc = x_ref[pl.ds(start, chunk), :].astype(jnp.bfloat16)   # (chunk, n_in)
        # h = w1 @ xc^T  (trans-B dot): puts the batch on the lane axis so every
        # later op and the final store are lane-dense.
        h = lax.dot_general(w1, xc, (((1,), (1,)), ((), ())),
                            preferred_element_type=jnp.float32)   # (n_hidden, chunk)
        h = jnp.maximum(h + b1, 0.0).astype(jnp.bfloat16)          # bias + ReLU + cast
        y = jnp.dot(w2, h, preferred_element_type=jnp.float32)     # (n_out, chunk)
        o_ref[:, pl.ds(start, chunk)] = jax.nn.sigmoid(y + b2)     # f32 store


@functools.partial(jax.jit, static_argnames=("tb", "chunk"))
def ffd_forward(x, w1, b1, w2, b2, *, tb=65536, chunk=512):
    """x: (B, n_input) f32; w1: (n_hidden, n_input); b1: (n_hidden,);
    w2: (n_out, n_hidden); b2: (n_out,). Returns (B, n_out) float32."""
    B, n_input = x.shape
    n_hidden = w1.shape[0]
    n_out = w2.shape[0]

    # Lane chunk: multiple of 128, <= 512, no larger than the 128-padded batch.
    chunk = max(128, (min(chunk, 512) // 128) * 128)
    chunk = min(chunk, 128 * _cdiv(B, 128))

    # Batch tile: multiple of chunk; capped so double-buffered x + (sublane
    # padded) out tiles stay well under v7x's 64 MiB VMEM; split into >= 2 grid
    # steps when possible so both v7x TensorCores get work.
    bytes_per_row = 2 * (n_input * 4 + max(8, n_out) * 4)   # dbl-buffered x + out
    tb_cap = max(chunk, (40 * 1024 * 1024 // bytes_per_row) // chunk * chunk)

    b_units = _cdiv(B, chunk)
    tb_units = max(1, min(tb, tb_cap) // chunk)
    n_steps = _cdiv(b_units, tb_units)
    if n_steps == 1 and b_units >= 2:
        n_steps = 2                            # v7x megacore: give both TCs work
    tb_units = _cdiv(b_units, n_steps)
    n_steps = _cdiv(b_units, tb_units)         # no fully-empty trailing step
    tb = tb_units * chunk

    # Resident params (tiny): weights in bf16, biases in f32 column vectors.
    w1_b = w1.astype(jnp.bfloat16)             # (n_hidden, n_input)
    w2_b = w2.astype(jnp.bfloat16)             # (n_out, n_hidden)
    b1_c = b1.reshape(n_hidden, 1).astype(jnp.float32)
    b2_c = b2.reshape(n_out, 1).astype(jnp.float32)

    vmem_need = 2 * tb * (n_input * 4 + max(8, n_out) * 4) + (2 << 20)
    vmem_limit = int(min(96 * 1024 * 1024, max(32 * 1024 * 1024, 2 * vmem_need)))

    cost = pl.CostEstimate(
        flops=2 * n_steps * tb * (n_input * n_hidden + n_hidden * n_out),
        transcendentals=n_steps * tb * n_out,
        bytes_accessed=(B * n_input * 4 + B * n_out * 4
                        + (n_hidden * n_input + n_out * n_hidden) * 2
                        + (n_hidden + n_out) * 4),
    )

    out_t = pl.pallas_call(
        functools.partial(ffd_kernel, chunk=chunk),
        out_shape=jax.ShapeDtypeStruct((n_out, B), jnp.float32),
        grid=(n_steps,),
        in_specs=[
            pl.BlockSpec((tb, n_input), lambda i: (i, 0)),         # x tiles (ragged tail OK)
            pl.BlockSpec((n_hidden, n_input), lambda i: (0, 0)),   # w1 resident
            pl.BlockSpec((n_hidden, 1), lambda i: (0, 0)),         # b1 resident
            pl.BlockSpec((n_out, n_hidden), lambda i: (0, 0)),     # w2 resident
            pl.BlockSpec((n_out, 1), lambda i: (0, 0)),            # b2 resident
        ],
        out_specs=pl.BlockSpec((n_out, tb), lambda i: (0, i)),
        compiler_params=pltpu.CompilerParams(
            dimension_semantics=("parallel",),   # megacore sharding on v7x
            vmem_limit_bytes=vmem_limit,
        ),
        cost_estimate=cost,
    )(x, w1_b, b1_c, w2_b, b2_c)

    # (n_out, B) -> (B, n_out); for n_out == 1 this is a layout-free reshape.
    return jnp.transpose(out_t)


def init_params(key, n_input, n_hidden, n_output=1):
    """Deterministic init mimicking nn.Linear's uniform(-1/sqrt(fan_in), +).
    Weights kept in PyTorch orientation: fc1 (n_hidden, n_input), fc2 (n_out, n_hidden)."""
    k1, k2, k3, k4 = jax.random.split(key, 4)
    bound1 = 1.0 / jnp.sqrt(jnp.float32(n_input))
    bound2 = 1.0 / jnp.sqrt(jnp.float32(n_hidden))
    w1 = jax.random.uniform(k1, (n_hidden, n_input), jnp.float32, -bound1, bound1)
    b1 = jax.random.uniform(k2, (n_hidden,), jnp.float32, -bound1, bound1)
    w2 = jax.random.uniform(k3, (n_output, n_hidden), jnp.float32, -bound2, bound2)
    b2 = jax.random.uniform(k4, (n_output,), jnp.float32, -bound2, bound2)
    return w1, b1, w2, b2


if __name__ == "__main__":
    key = jax.random.PRNGKey(0)
    kx, kp = jax.random.split(key)

    B, n_input, n_hidden, n_output = 8, 16, 32, 1
    x = jax.random.normal(kx, (B, n_input), jnp.float32)
    w1, b1, w2, b2 = init_params(kp, n_input, n_hidden, n_output)

    out = jax.block_until_ready(ffd_forward(x, w1, b1, w2, b2))

    # Reference in plain JAX (same math as the PyTorch module, f32 throughout).
    ref = jax.nn.sigmoid(jnp.maximum(x @ w1.T + b1, 0.0) @ w2.T + b2)
    assert out.shape == (B, n_output)
    # Tolerance loosened for the bf16 MXU inputs (f32 accumulation).
    assert jnp.allclose(out, ref, atol=2e-2, rtol=2e-2)

    print("KERNEL_OK")
</pallas_src>

<mosaic_0001>
module attributes {stable_mosaic.version = 11 : i64} {
  func.func @ffd_kernel(%arg0: i32, %arg1: memref<128x16xf32, #tpu.memory_space<vmem>>, %arg2: memref<32x16xbf16, #tpu.memory_space<vmem>>, %arg3: memref<32x1xf32, #tpu.memory_space<vmem>>, %arg4: memref<1x32xbf16, #tpu.memory_space<vmem>>, %arg5: memref<1x1xf32, #tpu.memory_space<vmem>>, %arg6: memref<1x128xf32, #tpu.memory_space<vmem>>) attributes {dimension_semantics = [#tpu.dimension_semantics<parallel>], iteration_bounds = array<i64: 1>, scalar_prefetch = 0 : i64, scratch_operands = 0 : i64, tpu.core_type = #tpu.core_type<tc>, window_params = [{transform_indices = @transform_0, window_bounds = array<i64: 128, 16>}, {pipeline_mode = #tpu.pipeline_mode<synchronous>, transform_indices = @transform_1, window_bounds = array<i64: 32, 16>}, {pipeline_mode = #tpu.pipeline_mode<synchronous>, transform_indices = @transform_2, window_bounds = array<i64: 32, 1>}, {pipeline_mode = #tpu.pipeline_mode<synchronous>, transform_indices = @transform_3, window_bounds = array<i64: 1, 32>}, {pipeline_mode = #tpu.pipeline_mode<synchronous>, transform_indices = @transform_4, window_bounds = array<i64: 1, 1>}, {transform_indices = @transform_5, window_bounds = array<i64: 1, 128>}]} {
    %c0 = arith.constant 0 : index
    %c0_0 = arith.constant 0 : index
    %0 = vector.load %arg2[%c0, %c0_0] : memref<32x16xbf16, #tpu.memory_space<vmem>>, vector<32x16xbf16>
    %c0_1 = arith.constant 0 : index
    %c0_2 = arith.constant 0 : index
    %1 = vector.load %arg3[%c0_1, %c0_2] : memref<32x1xf32, #tpu.memory_space<vmem>>, vector<32x1xf32>
    %c0_3 = arith.constant 0 : index
    %c0_4 = arith.constant 0 : index
    %2 = vector.load %arg4[%c0_3, %c0_4] : memref<1x32xbf16, #tpu.memory_space<vmem>>, vector<1x32xbf16>
    %c0_5 = arith.constant 0 : index
    %c0_6 = arith.constant 0 : index
    %3 = vector.load %arg5[%c0_5, %c0_6] : memref<1x1xf32, #tpu.memory_space<vmem>>, vector<1x1xf32>
    %c0_i32 = arith.constant 0 : i32
    %c1_i32 = arith.constant 1 : i32
    %4 = arith.muli %c0_i32, %c1_i32 : i32
    %c0_i32_7 = arith.constant 0 : i32
    %5 = arith.addi %c0_i32_7, %4 : i32
    %c128_i32 = arith.constant 128 : i32
    %6 = arith.muli %5, %c128_i32 : i32
    %7 = tpu.assume_multiple %6, 128 : i32
    %8 = arith.index_cast %7 : i32 to index
    %c0_8 = arith.constant 0 : index
    %9 = vector.load %arg1[%8, %c0_8] : memref<128x16xf32, #tpu.memory_space<vmem>>, vector<128x16xf32>
    %10 = arith.truncf %9 : vector<128x16xf32> to vector<128x16xbf16>
    %cst = arith.constant dense<0.000000e+00> : vector<32x128xf32>
    %11 = tpu.matmul %0, %10, %cst {dimension_numbers = #tpu.dot_dimension_numbers<[1], [1], [0], [0], [0, 0, 1, 0], [], []>} : vector<32x16xbf16>, vector<128x16xbf16>, vector<32x128xf32> -> vector<32x128xf32>
    %12 = vector.broadcast %1 : vector<32x1xf32> to vector<32x128xf32>
    %13 = arith.addf %11, %12 : vector<32x128xf32>
    %cst_9 = arith.constant 0.000000e+00 : f32
    %14 = vector.broadcast %cst_9 : f32 to vector<32x128xf32>
    %15 = arith.maximumf %13, %14 : vector<32x128xf32>
    %16 = arith.truncf %15 : vector<32x128xf32> to vector<32x128xbf16>
    %cst_10 = arith.constant dense<0.000000e+00> : vector<1x128xf32>
    %17 = tpu.matmul %2, %16, %cst_10 {dimension_numbers = #tpu.dot_dimension_numbers<[1], [0], [0], [1], [0, 0, 1, 1], [], []>} : vector<1x32xbf16>, vector<32x128xbf16>, vector<1x128xf32> -> vector<1x128xf32>
    %18 = vector.broadcast %3 : vector<1x1xf32> to vector<1x128xf32>
    %19 = arith.addf %17, %18 : vector<1x128xf32>
    %20 = arith.negf %19 : vector<1x128xf32>
    %21 = math.exp %20 : vector<1x128xf32>
    %cst_11 = arith.constant 1.000000e+00 : f32
    %22 = vector.broadcast %cst_11 : f32 to vector<1x128xf32>
    %23 = arith.addf %22, %21 : vector<1x128xf32>
    %24 = arith.divf %22, %23 : vector<1x128xf32>
    %c0_12 = arith.constant 0 : index
    %25 = arith.index_cast %7 : i32 to index
    %26 = vector.load %arg6[%c0_12, %25] : memref<1x128xf32, #tpu.memory_space<vmem>>, vector<1x128xf32>
    tpu.vector_store %arg6[%c0_12, %25], %24 {strides = array<i32>} : memref<1x128xf32, #tpu.memory_space<vmem>>, vector<1x128xf32>,
    %c1_i32_13 = arith.constant 1 : i32
    return
  }
  func.func @transform_0(%arg0: i32) -> (i32, i32) {
    %c0_i32 = arith.constant 0 : i32
    %c0_i32_0 = arith.constant 0 : i32
    return %arg0, %c0_i32 : i32, i32
  }
  func.func @transform_1(%arg0: i32) -> (i32, i32) {
    %c0_i32 = arith.constant 0 : i32
    %c0_i32_0 = arith.constant 0 : i32
    %c0_i32_1 = arith.constant 0 : i32
    return %c0_i32, %c0_i32_0 : i32, i32
  }
  func.func @transform_2(%arg0: i32) -> (i32, i32) {
    %c0_i32 = arith.constant 0 : i32
    %c0_i32_0 = arith.constant 0 : i32
    %c0_i32_1 = arith.constant 0 : i32
    return %c0_i32, %c0_i32_0 : i32, i32
  }
  func.func @transform_3(%arg0: i32) -> (i32, i32) {
    %c0_i32 = arith.constant 0 : i32
    %c0_i32_0 = arith.constant 0 : i32
    %c0_i32_1 = arith.constant 0 : i32
    return %c0_i32, %c0_i32_0 : i32, i32
  }
  func.func @transform_4(%arg0: i32) -> (i32, i32) {
    %c0_i32 = arith.constant 0 : i32
    %c0_i32_0 = arith.constant 0 : i32
    %c0_i32_1 = arith.constant 0 : i32
    return %c0_i32, %c0_i32_0 : i32, i32
  }
  func.func @transform_5(%arg0: i32) -> (i32, i32) {
    %c0_i32 = arith.constant 0 : i32
    %c0_i32_0 = arith.constant 0 : i32
    return %c0_i32, %arg0 : i32, i32
  }
}

</mosaic_0001>

<llo_original>
// kernel: ffd_forward.1
$region0: #{ffd_forward.1}
  #allocation0 [shape = 'u32[]', space=smem, size = 0x4, offset = 0x4, fixed_abs, tag = 'smem constant byte address 0x4 - core index']
  #allocation1 [shape = 'u32[144,128]{1,0:T(1,128)}', space=vmem, size = 0x12000, scoped, tag = 'internal scratch']
  #allocation2 [shape = 'f32[1,1]{1,0:T(1,128)S(1)}', space=vmem, size = 0x200, scoped, tag = 'scoped memory for ffd_forward.1']
  %s0 = inlined_call_operand.vmem [shape: f32[8,16], index: 0, kind: input, shape index: {}]
  %s1 = inlined_call_operand.vmem [shape: bf16[32,16], index: 1, kind: input, shape index: {}]
  %s2 = inlined_call_operand.vmem [shape: f32[32,1], index: 2, kind: input, shape index: {}]
  %s3 = inlined_call_operand.vmem [shape: bf16[1,32], index: 3, kind: input, shape index: {}]
  %s4 = inlined_call_operand.<no memory space> [shape: f32[1,1], index: 4, kind: input, shape index: {}]
  %s5 = inlined_call_operand.hbm [shape: f32[1,8], index: 5, kind: output, shape index: {}]
  %s6 = sld [smem:[#allocation0]]
  $region30: #{ffd_forward.1} parent=0
    _
  %s8 = ssub.s32 1, %s6
  %s9 = scalar_select 0, %s8, %s6
  %v10 = vstv %s4
  %11 = vst [vmem:[#allocation2] sm:$0x1] %v10
  $region1: #{ffd_forward.1} parent=0
    #allocation3 [shape = 'u8[512]{0}', space=vmem, size = 0x400, scoped, tag = 'output window, operand 0, single buffered']
    #allocation4 [shape = 's32[1]{0}', space=sflag, size = 0x4, scoped, tag = 'scoped memory for ffd_forward.1']
    %12 = vsyncpa [#allocation4], 0
    // Predicated region
    $region2: #{ffd_forward.1} parent=1 // pred_check
      _
    $region3: #{ffd_forward.1} parent=1 // pred_check_branch
      %14 = sbr.rel (0) target = $region5
    $region4: #{ffd_forward.1} parent=1 // pred_region
      _
    $region5: #{ffd_forward.1} parent=1 // pred_fallthru
      _
    // Predicated region
    $region6: #{ffd_forward.1} parent=1 // pred_check
      _
    $region7: #{ffd_forward.1} parent=1 // pred_check_branch
      %16 = sbr.rel (0) target = $region9
    $region8: #{ffd_forward.1} parent=1 // pred_region
      _
    $region9: #{ffd_forward.1} parent=1 // pred_fallthru
      _
    // Predicated region
    $region10: #{ffd_forward.1} parent=1 // pred_check
      _
    $region11: #{ffd_forward.1} parent=1 // pred_check_branch
      %18 = sbr.rel (0) target = $region13
    $region12: #{ffd_forward.1} parent=1 // pred_region
      _
    $region13: #{ffd_forward.1} parent=1 // pred_fallthru
      _
    // Predicated region
    $region14: #{ffd_forward.1} parent=1 // pred_check
      _
    $region15: #{ffd_forward.1} parent=1 // pred_check_branch
      %20 = sbr.rel (0) target = $region17
    $region16: #{ffd_forward.1} parent=1 // pred_region
      _
    $region17: #{ffd_forward.1} parent=1 // pred_fallthru
      _
    // Predicated region
    $region18: #{ffd_forward.1} parent=1 // pred_check
      _
    $region19: #{ffd_forward.1} parent=1 // pred_check_branch
      %22 = sbr.rel (0) target = $region21
    $region20: #{ffd_forward.1} parent=1 // pred_region
      _
    $region21: #{ffd_forward.1} parent=1 // pred_fallthru
      _
    %v24 = vld [vmem:[%s1] sm:$0xf]
    %v25 = vld [vmem:[%s1 + $0x4] sm:$0xf]
    %v26 = vld [vmem:[%s1 + $0x8] sm:$0xf]
    %v27 = vld [vmem:[%s1 + $0xc] sm:$0xf]
    %v28 = vld [vmem:[%s2] sm:$0xff]
    %v29 = vld [vmem:[%s2 + $0x8] sm:$0xff]
    %v30 = vld [vmem:[%s2 + $0x10] sm:$0xff]
    %v31 = vld [vmem:[%s2 + $0x18] sm:$0xff]
    %v32 = vld [vmem:[%s3] sm:$0x1]
    %v33 = vld [vmem:[#allocation2] sm:$0x1]
    %v34 = vld [vmem:[%s0] sm:$0xff]
    %v35 = vld [vmem:[%s0 + $0x8] sm:$0xff]
    %v36 = vld [vmem:[%s0 + $0x10] sm:$0xff]
    %v37 = vld [vmem:[%s0 + $0x18] sm:$0xff]
    %v38 = vld [vmem:[%s0 + $0x20] sm:$0xff]
    %v39 = vld [vmem:[%s0 + $0x28] sm:$0xff]
    %v40 = vld [vmem:[%s0 + $0x30] sm:$0xff]
    %v41 = vld [vmem:[%s0 + $0x38] sm:$0xff]
    %v42 = vld [vmem:[%s0 + $0x40] sm:$0xff]
    %v43 = vld [vmem:[%s0 + $0x48] sm:$0xff]
    %v44 = vld [vmem:[%s0 + $0x50] sm:$0xff]
    %v45 = vld [vmem:[%s0 + $0x58] sm:$0xff]
    %v46 = vld [vmem:[%s0 + $0x60] sm:$0xff]
    %v47 = vld [vmem:[%s0 + $0x68] sm:$0xff]
    %v48 = vld [vmem:[%s0 + $0x70] sm:$0xff]
    %v49 = vld [vmem:[%s0 + $0x78] sm:$0xff]
    %v50 = vpack.c.bf16 %v35, %v34
    %v51 = vpack.c.bf16 %v37, %v36
    %v52 = vpack.c.bf16 %v39, %v38
    %v53 = vpack.c.bf16 %v41, %v40
    %v54 = vpack.c.bf16 %v43, %v42
    %v55 = vpack.c.bf16 %v45, %v44
    %v56 = vpack.c.bf16 %v47, %v46
    %v57 = vpack.c.bf16 %v49, %v48
    %59 = vset.pattern.permute.xlu0 0
    %60 = vperm.xlu0 %59, %v28
    %v61 = vpop.permute.xlu0 %60
    %64 = vset.pattern.permute.xlu0 0
    %65 = vperm.xlu0 %64, %v29
    %v66 = vpop.permute.xlu0 %65
    %69 = vset.pattern.permute.xlu0 0
    %70 = vperm.xlu0 %69, %v30
    %v71 = vpop.permute.xlu0 %70
    %74 = vset.pattern.permute.xlu0 0
    %75 = vperm.xlu0 %74, %v31
    %v76 = vpop.permute.xlu0 %75
    %v82 = vunpack.c.l.b16 %v24
    %v83 = vunpack.c.l.b16 %v25
    %v84 = vunpack.c.l.b16 %v26
    %v85 = vunpack.c.l.b16 %v27
    %v86 = vpack.c.b16 %v83, %v82
    %v87 = vpack.c.b16 %v85, %v84
    %vm88 = vcmask 130048
    %v90 = vsel %vm88, %v86, 0
    %v93 = vsel %vm88, %v87, 0
    %v96 = vsel %vm88, %v50, 0
    %v99 = vsel %vm88, %v51, 0
    %v102 = vsel %vm88, %v52, 0
    %v105 = vsel %vm88, %v53, 0
    %v108 = vsel %vm88, %v54, 0
    %v111 = vsel %vm88, %v55, 0
    %v114 = vsel %vm88, %v56, 0
    %v117 = vsel %vm88, %v57, 0
    %119 = vmatprep.subr.bf16.mxu0 0
    %120 = vmatpush1.bf16.xpose.msra.mxu0 %v96
    %121 = vmatprep.subr.bf16.mxu0 0
    %122 = vmatpush1.bf16.xpose.msra.mxu0 %v99
    %123 = vmatprep.subr.bf16.mxu0 0
    %124 = vmatpush1.bf16.xpose.msra.mxu0 %v102
    %125 = vmatprep.subr.bf16.mxu0 0
    %126 = vmatpush1.bf16.xpose.msra.mxu0 %v105
    %127 = vmatprep.subr.bf16.mxu0 0
    %128 = vmatpush1.bf16.xpose.msra.mxu0 %v108
    %129 = vmatprep.subr.bf16.mxu0 0
    %130 = vmatpush1.bf16.xpose.msra.mxu0 %v111
    %131 = vmatprep.subr.bf16.mxu0 0
    %132 = vmatpush1.bf16.xpose.msra.mxu0 %v114
    %133 = vmatprep.subr.bf16.mxu0 0
    %134 = vmatpush1.bf16.xpose.msra.mxu0 %v117
    %135 = vmatprep.subr.bf16.mxu0 0
    %136 = vmatpush1.bf16.xpose.msra.mxu0 0
    %137 = vmatprep.subr.bf16.mxu0 0
    %138 = vmatpush1.bf16.xpose.msra.mxu0 0
    %139 = vmatprep.subr.bf16.mxu0 0
    %140 = vmatpush1.bf16.xpose.msra.mxu0 0
    %141 = vmatprep.subr.bf16.mxu0 0
    %142 = vmatpush1.bf16.xpose.msra.mxu0 0
    %143 = vmatprep.subr.bf16.mxu0 0
    %144 = vmatpush1.bf16.xpose.msra.mxu0 0
    %145 = vmatprep.subr.bf16.mxu0 0
    %146 = vmatpush1.bf16.xpose.msra.mxu0 0
    %147 = vmatprep.subr.bf16.mxu0 0
    %148 = vmatpush1.bf16.xpose.msra.mxu0 0
    %149 = vmatprep.subr.bf16.mxu0 0
    %150 = vmatpush1.bf16.xpose.msra.mxu0 0
    %151 = vmatprep.mubr.bf16.mxu0 0
    %152 = vmatmul.mubr.bf16.gmra.mrb[0].mxu0 %v90
    %v153 = vpop.f32.mrb[0].mxu0
    %v154 = vadd.f32 %v61, %v153
    %v155 = vpop.f32.mrb[0].mxu0
    %v156 = vpop.f32.mrb[0].mxu0
    %v157 = vadd.f32 %v66, %v156
    %v158 = vpop.f32.mrb[0].mxu0
    %159 = vmatprep.mubr.bf16.mxu0 0
    %160 = vmatmul.mubr.bf16.gmra.mrb[0].mxu0 %v93
    %v161 = vpop.f32.mrb[0].mxu0
    %v162 = vadd.f32 %v71, %v161
    %v163 = vpop.f32.mrb[0].mxu0
    %v164 = vpop.f32.mrb[0].mxu0
    %v165 = vadd.f32 %v76, %v164
    %v166 = vpop.f32.mrb[0].mxu0
    %167 = vdwg.mxu0
    %v168 = vmax.f32 %v154, 0.0
    %v169 = vmax.f32 %v157, 0.0
    %v170 = vmax.f32 %v162, 0.0
    %v171 = vmax.f32 %v165, 0.0
    %v172 = vpack.c.bf16 %v169, %v168
    %v173 = vpack.c.bf16 %v171, %v170
    %175 = vset.pattern.permute.xlu0 0
    %176 = vperm.xlu0 %175, %v33
    %v177 = vpop.permute.xlu0 %176
    %v179 = vlaneseq
    %v180 = vshrl.u32 %v179, 7
    %v181 = vsub.s32 0, %v180
    %v182 = vrot.slane %v177, %v181
    %vm183 = vcmask 261120
    %v185 = vsel %vm183, %v32, 0
    %187 = vmatprep.subr.bf16.mxu0 0
    %188 = vmatpush1.bf16.msra.mxu0 %v172
    %189 = vmatprep.subr.bf16.mxu0 0
    %190 = vmatpush1.bf16.msra.mxu0 %v173
    %191 = vmatprep.subr.bf16.mxu0 0
    %192 = vmatpush1.bf16.msra.mxu0 0
    %193 = vmatprep.subr.bf16.mxu0 0
    %194 = vmatpush1.bf16.msra.mxu0 0
    %195 = vmatprep.subr.bf16.mxu0 0
    %196 = vmatpush1.bf16.msra.mxu0 0
    %197 = vmatprep.subr.bf16.mxu0 0
    %198 = vmatpush1.bf16.msra.mxu0 0
    %199 = vmatprep.subr.bf16.mxu0 0
    %200 = vmatpush1.bf16.msra.mxu0 0
    %201 = vmatprep.subr.bf16.mxu0 0
    %202 = vmatpush1.bf16.msra.mxu0 0
    %203 = vmatprep.subr.bf16.mxu0 0
    %204 = vmatpush1.bf16.msra.mxu0 0
    %205 = vmatprep.subr.bf16.mxu0 0
    %206 = vmatpush1.bf16.msra.mxu0 0
    %207 = vmatprep.subr.bf16.mxu0 0
    %208 = vmatpush1.bf16.msra.mxu0 0
    %209 = vmatprep.subr.bf16.mxu0 0
    %210 = vmatpush1.bf16.msra.mxu0 0
    %211 = vmatprep.subr.bf16.mxu0 0
    %212 = vmatpush1.bf16.msra.mxu0 0
    %213 = vmatprep.subr.bf16.mxu0 0
    %214 = vmatpush1.bf16.msra.mxu0 0
    %215 = vmatprep.subr.bf16.mxu0 0
    %216 = vmatpush1.bf16.msra.mxu0 0
    %217 = vmatprep.subr.bf16.mxu0 0
    %218 = vmatpush1.bf16.msra.mxu0 0
    %219 = vmatprep.mubr.bf16.mxu0 0
    %220 = vmatmul.mubr.bf16.gmra.mrb[0].mxu0 %v185
    %v221 = vpop.f32.mrb[0].mxu0
    %v222 = vadd.f32 %v182, %v221
    %v223 = vpop.f32.mrb[0].mxu0
    %v224 = vpop.f32.mrb[0].mxu0
    %v225 = vpop.f32.mrb[0].mxu0
    %226 = vdwg.mxu0
    %v227 = vxor.u32 %v222, 2147483648
    %v228 = vmul.f32 %v227, 1.442695
    %v229 = vpow.pop %v228
    %v230 = vadd.f32 %v229, 1.0
    %v231 = vrcp.pop %v230
    %v232 = vmul.f32 1.0, %v231
    %233 = vst [vmem:[#allocation3] sm:$0x1] %v232
    // Predicated region
    $region22: #{ffd_forward.1} parent=1 // pred_check
      _
    $region23: #{ffd_forward.1} parent=1 // pred_check_branch
      %235 = sbr.rel (0) target = $region25
    $region24: #{ffd_forward.1} parent=1 // pred_region
      %s237 = ssub.s32 16, 16
      %238 = vsyncadd [#allocation4], %s237
      %s240 = sshll.u32 [#allocation3], 4
      %s241 = int_to_ptr.vmem [resolvable:$true] %s240
      %243 = dma.vmem_to_hbm [thread:$0]  %s241, 16, %s5, [#allocation4]
    $region25: #{ffd_forward.1} parent=1 // pred_fallthru
      _
    // Predicated region
    $region26: #{ffd_forward.1} parent=1 // pred_check
      _
    $region27: #{ffd_forward.1} parent=1 // pred_check_branch
      %245 = sbr.rel (0) target = $region29
    $region28: #{ffd_forward.1} parent=1 // pred_region
      %246 = dma.done [#allocation4], 16
    $region29: #{ffd_forward.1} parent=1 // pred_fallthru
      _
    %247 = vsyncpa [#allocation4], 1

</llo_original>
